<compile_context>
chip_gen: v5e
topology: v5e:2x2
jax: 0.10.0
libtpu: 0.0.40
codegen_flags: <defaults>
</compile_context>

<pallas_src>
import functools

import numpy as np

import jax
import jax.numpy as jnp
from jax.experimental import pallas as pl
from jax.experimental.pallas import tpu as pltpu


def _round_up(x, m):
    return -(-x // m) * m


def _user_movielens_kernel(g_ref, a_ref, o_ref, z_ref, tab_ref, out_ref, *,
                           offsets):
    """Fused gather-concat of one batch tile as a single multi-hot matmul.

    g/a/o/z_ref: (B_TILE, 1) int32   -- raw per-table indices
    tab_ref:     (N_pad, 4*D) f32    -- block-diagonal packed tables (resident)
    out_ref:     (B_TILE, 4*D) f32   -- concatenated embeddings
    offsets:     static Python ints  -- row offset of each table in tab_ref
    """
    n_pad = tab_ref.shape[0]
    iota = jax.lax.broadcasted_iota(jnp.int32, (1, n_pad), 1)     # (1, N_pad)

    # Multi-hot: each batch row has exactly one 1 per table, in disjoint row
    # ranges of the block-diagonal table, so OR-ing the one-hots is exact.
    # Offsets are static ints folded at trace time (tiny (B,1) add per table).
    hot = None
    for idx_ref, off in zip((g_ref, a_ref, o_ref, z_ref), offsets):
        match = (idx_ref[...] + off) == iota                      # (B_TILE, N_pad)
        hot = match if hot is None else jnp.logical_or(hot, match)
    multihot = hot.astype(tab_ref.dtype)

    # One MXU pass: (B_TILE, N_pad) x (N_pad, 4*D) -> (B_TILE, 4*D).
    # HIGHEST precision keeps the f32 table values exact (gather semantics).
    out_ref[...] = jnp.dot(multihot, tab_ref[...],
                           preferred_element_type=jnp.float32,
                           precision=jax.lax.Precision.HIGHEST)


def pack_user_movielens_params(g_tab, a_tab, o_tab, z_tab):
    """Init-time packing: block-diagonal table + static row offsets."""
    tables = (g_tab, a_tab, o_tab, z_tab)
    d = g_tab.shape[1]
    for t in tables:
        assert t.shape[1] == d, "all embedding tables must share embedding_dim"

    sizes = [int(t.shape[0]) for t in tables]
    offsets = tuple(int(o) for o in np.cumsum([0] + sizes[:-1]))
    n_total = sum(sizes)
    # Pad contraction dim to a multiple of 128: lane-dense multi-hot operand,
    # full MXU K-passes (extra zero rows are free on the MXU).
    n_pad = _round_up(n_total, 128)

    packed = jnp.zeros((n_pad, 4 * d), dtype=jnp.float32)
    for i, (tab, off) in enumerate(zip(tables, offsets)):
        packed = packed.at[off:off + tab.shape[0], i * d:(i + 1) * d].set(
            tab.astype(jnp.float32))
    return packed, offsets


def user_movielens_forward(gender_idx, age_idx, occupation_idx, area_idx,
                           packed_tab, offsets, *, b_tile=1024):
    """Pallas wrapper. Index args are (B,) ints; packed_tab is (N_pad, 4*D)."""
    b = gender_idx.shape[0]
    n_pad, four_d = packed_tab.shape
    # Note: 4*embedding_dim == 128 here -> single unmasked lane-dense store.
    # Other configs still work (masked stores), just less efficiently.

    # Batch tile: multiple of 8, capped by the (rounded-up) batch size.
    b_tile = max(8, _round_up(min(b_tile, _round_up(b, 8)), 8))
    b_pad = _round_up(b, b_tile)
    grid = (b_pad // b_tile,)

    def prep(v):
        v = v.astype(jnp.int32).reshape(b, 1)
        if b_pad != b:
            v = jnp.pad(v, ((0, b_pad - b), (0, 0)))
        return v

    g = prep(gender_idx)
    a = prep(age_idx)
    o = prep(occupation_idx)
    z = prep(area_idx)

    idx_spec = pl.BlockSpec((b_tile, 1), lambda i: (i, 0))
    tab_spec = pl.BlockSpec((n_pad, four_d), lambda i: (0, 0))   # resident
    out_spec = pl.BlockSpec((b_tile, four_d), lambda i: (i, 0))

    kernel = functools.partial(_user_movielens_kernel, offsets=offsets)

    out = pl.pallas_call(
        kernel,
        out_shape=jax.ShapeDtypeStruct((b_pad, four_d), jnp.float32),
        grid=grid,
        in_specs=[idx_spec, idx_spec, idx_spec, idx_spec, tab_spec],
        out_specs=out_spec,
        compiler_params=pltpu.CompilerParams(
            dimension_semantics=("parallel",)),
    )(g, a, o, z, packed_tab)

    # Padded batch rows (zero indices) produce garbage rows; slice them off.
    return out[:b]


def _reference(g_tab, a_tab, o_tab, z_tab, gi, ai, oi, zi):
    return jnp.concatenate([
        jnp.take(g_tab, gi, axis=0),
        jnp.take(a_tab, ai, axis=0),
        jnp.take(o_tab, oi, axis=0),
        jnp.take(z_tab, zi, axis=0),
    ], axis=1)


if __name__ == "__main__":
    # Config (mirrors the module's __init__ arithmetic: num_X - 1 rows each).
    num_gender = 3       # -> 2 embeddings
    num_age = 8          # -> 7 embeddings
    num_occupation = 22  # -> 21 embeddings
    num_zipcode = 100    # -> 99 embeddings
    embedding_dim = 32   # 4 * D = 128 -> lane-dense output
    batch = 8

    n_g = num_gender - 1
    n_a = num_age - 1
    n_o = num_occupation - 1
    n_z = num_zipcode - 1

    key = jax.random.PRNGKey(0)
    kg, ka, ko, kz, ki = jax.random.split(key, 5)

    # Deterministic parameter init (nn.Embedding default is N(0, 1)).
    g_tab = jax.random.normal(kg, (n_g, embedding_dim), dtype=jnp.float32)
    a_tab = jax.random.normal(ka, (n_a, embedding_dim), dtype=jnp.float32)
    o_tab = jax.random.normal(ko, (n_o, embedding_dim), dtype=jnp.float32)
    z_tab = jax.random.normal(kz, (n_z, embedding_dim), dtype=jnp.float32)

    ki_g, ki_a, ki_o, ki_z = jax.random.split(ki, 4)
    gender_idx = jax.random.randint(ki_g, (batch,), 0, n_g, dtype=jnp.int32)
    age_idx = jax.random.randint(ki_a, (batch,), 0, n_a, dtype=jnp.int32)
    occupation_idx = jax.random.randint(ki_o, (batch,), 0, n_o, dtype=jnp.int32)
    area_idx = jax.random.randint(ki_z, (batch,), 0, n_z, dtype=jnp.int32)

    # Init-time packing (done once; not part of per-step cost).
    packed_tab, offsets = pack_user_movielens_params(g_tab, a_tab, o_tab, z_tab)

    # Check 1: single-tile grid path.
    out = user_movielens_forward(gender_idx, age_idx, occupation_idx, area_idx,
                                 packed_tab, offsets)
    out = jax.block_until_ready(out)
    ref = _reference(g_tab, a_tab, o_tab, z_tab,
                     gender_idx, age_idx, occupation_idx, area_idx)
    assert out.shape == (batch, 4 * embedding_dim), out.shape
    assert jnp.allclose(out, ref, atol=1e-6), "mismatch vs reference (single tile)"

    # Check 2: multi-tile grid path (non-divisible batch -> padded tiles).
    batch2 = 20
    k2 = jax.random.split(jax.random.PRNGKey(1), 4)
    gi2 = jax.random.randint(k2[0], (batch2,), 0, n_g, dtype=jnp.int32)
    ai2 = jax.random.randint(k2[1], (batch2,), 0, n_a, dtype=jnp.int32)
    oi2 = jax.random.randint(k2[2], (batch2,), 0, n_o, dtype=jnp.int32)
    zi2 = jax.random.randint(k2[3], (batch2,), 0, n_z, dtype=jnp.int32)
    out2 = user_movielens_forward(gi2, ai2, oi2, zi2, packed_tab, offsets,
                                  b_tile=8)
    out2 = jax.block_until_ready(out2)
    ref2 = _reference(g_tab, a_tab, o_tab, z_tab, gi2, ai2, oi2, zi2)
    assert out2.shape == (batch2, 4 * embedding_dim), out2.shape
    assert jnp.allclose(out2, ref2, atol=1e-6), "mismatch vs reference (multi tile)"

    print("KERNEL_OK")
</pallas_src>

<mosaic_0001>
module attributes {stable_mosaic.version = 11 : i64} {
  func.func @_user_movielens_kernel(%arg0: i32, %arg1: memref<8x1xi32, #tpu.memory_space<vmem>>, %arg2: memref<8x1xi32, #tpu.memory_space<vmem>>, %arg3: memref<8x1xi32, #tpu.memory_space<vmem>>, %arg4: memref<8x1xi32, #tpu.memory_space<vmem>>, %arg5: memref<256x128xf32, #tpu.memory_space<vmem>>, %arg6: memref<8x128xf32, #tpu.memory_space<vmem>>) attributes {dimension_semantics = [#tpu.dimension_semantics<parallel>], iteration_bounds = array<i64: 1>, scalar_prefetch = 0 : i64, scratch_operands = 0 : i64, tpu.core_type = #tpu.core_type<tc>, window_params = [{transform_indices = @transform_0, window_bounds = array<i64: 8, 1>}, {transform_indices = @transform_1, window_bounds = array<i64: 8, 1>}, {transform_indices = @transform_2, window_bounds = array<i64: 8, 1>}, {transform_indices = @transform_3, window_bounds = array<i64: 8, 1>}, {pipeline_mode = #tpu.pipeline_mode<synchronous>, transform_indices = @transform_4, window_bounds = array<i64: 256, 128>}, {transform_indices = @transform_5, window_bounds = array<i64: 8, 128>}]} {
    %0 = tpu.iota {dimensions = array<i32: 1>} : vector<1x256xi32>
    %c0 = arith.constant 0 : index
    %c0_0 = arith.constant 0 : index
    %1 = vector.load %arg1[%c0, %c0_0] : memref<8x1xi32, #tpu.memory_space<vmem>>, vector<8x1xi32>
    %c0_i32 = arith.constant 0 : i32
    %2 = vector.broadcast %c0_i32 : i32 to vector<8x1xi32>
    %3 = arith.addi %1, %2 : vector<8x1xi32>
    %4 = vector.broadcast %3 : vector<8x1xi32> to vector<8x256xi32>
    %5 = vector.broadcast %0 : vector<1x256xi32> to vector<8x256xi32>
    %6 = arith.cmpi eq, %4, %5 : vector<8x256xi32>
    %c0_1 = arith.constant 0 : index
    %c0_2 = arith.constant 0 : index
    %7 = vector.load %arg2[%c0_1, %c0_2] : memref<8x1xi32, #tpu.memory_space<vmem>>, vector<8x1xi32>
    %c2_i32 = arith.constant 2 : i32
    %8 = vector.broadcast %c2_i32 : i32 to vector<8x1xi32>
    %9 = arith.addi %7, %8 : vector<8x1xi32>
    %10 = vector.broadcast %9 : vector<8x1xi32> to vector<8x256xi32>
    %11 = vector.broadcast %0 : vector<1x256xi32> to vector<8x256xi32>
    %12 = arith.cmpi eq, %10, %11 : vector<8x256xi32>
    %13 = arith.ori %6, %12 : vector<8x256xi1>
    %c0_3 = arith.constant 0 : index
    %c0_4 = arith.constant 0 : index
    %14 = vector.load %arg3[%c0_3, %c0_4] : memref<8x1xi32, #tpu.memory_space<vmem>>, vector<8x1xi32>
    %c9_i32 = arith.constant 9 : i32
    %15 = vector.broadcast %c9_i32 : i32 to vector<8x1xi32>
    %16 = arith.addi %14, %15 : vector<8x1xi32>
    %17 = vector.broadcast %16 : vector<8x1xi32> to vector<8x256xi32>
    %18 = vector.broadcast %0 : vector<1x256xi32> to vector<8x256xi32>
    %19 = arith.cmpi eq, %17, %18 : vector<8x256xi32>
    %20 = arith.ori %13, %19 : vector<8x256xi1>
    %c0_5 = arith.constant 0 : index
    %c0_6 = arith.constant 0 : index
    %21 = vector.load %arg4[%c0_5, %c0_6] : memref<8x1xi32, #tpu.memory_space<vmem>>, vector<8x1xi32>
    %c30_i32 = arith.constant 30 : i32
    %22 = vector.broadcast %c30_i32 : i32 to vector<8x1xi32>
    %23 = arith.addi %21, %22 : vector<8x1xi32>
    %24 = vector.broadcast %23 : vector<8x1xi32> to vector<8x256xi32>
    %25 = vector.broadcast %0 : vector<1x256xi32> to vector<8x256xi32>
    %26 = arith.cmpi eq, %24, %25 : vector<8x256xi32>
    %27 = arith.ori %20, %26 : vector<8x256xi1>
    %28 = arith.extui %27 : vector<8x256xi1> to vector<8x256xi32>
    %29 = arith.sitofp %28 : vector<8x256xi32> to vector<8x256xf32>
    %c0_7 = arith.constant 0 : index
    %c0_8 = arith.constant 0 : index
    %30 = vector.load %arg5[%c0_7, %c0_8] : memref<256x128xf32, #tpu.memory_space<vmem>>, vector<256x128xf32>
    %cst = arith.constant dense<0.000000e+00> : vector<8x128xf32>
    %31 = tpu.matmul %29, %30, %cst {dimension_numbers = #tpu.dot_dimension_numbers<[1], [0], [0], [1], [0, 0, 1, 1], [], []>, precision = #tpu.contract_precision<fp32>} : vector<8x256xf32>, vector<256x128xf32>, vector<8x128xf32> -> vector<8x128xf32>
    %c0_9 = arith.constant 0 : index
    %c0_10 = arith.constant 0 : index
    %32 = vector.load %arg6[%c0_9, %c0_10] : memref<8x128xf32, #tpu.memory_space<vmem>>, vector<8x128xf32>
    tpu.vector_store %arg6[%c0_9, %c0_10], %31 {strides = array<i32>} : memref<8x128xf32, #tpu.memory_space<vmem>>, vector<8x128xf32>,
    return
  }
  func.func @transform_0(%arg0: i32) -> (i32, i32) {
    %c0_i32 = arith.constant 0 : i32
    %c0_i32_0 = arith.constant 0 : i32
    return %arg0, %c0_i32 : i32, i32
  }
  func.func @transform_1(%arg0: i32) -> (i32, i32) {
    %c0_i32 = arith.constant 0 : i32
    %c0_i32_0 = arith.constant 0 : i32
    return %arg0, %c0_i32 : i32, i32
  }
  func.func @transform_2(%arg0: i32) -> (i32, i32) {
    %c0_i32 = arith.constant 0 : i32
    %c0_i32_0 = arith.constant 0 : i32
    return %arg0, %c0_i32 : i32, i32
  }
  func.func @transform_3(%arg0: i32) -> (i32, i32) {
    %c0_i32 = arith.constant 0 : i32
    %c0_i32_0 = arith.constant 0 : i32
    return %arg0, %c0_i32 : i32, i32
  }
  func.func @transform_4(%arg0: i32) -> (i32, i32) {
    %c0_i32 = arith.constant 0 : i32
    %c0_i32_0 = arith.constant 0 : i32
    %c0_i32_1 = arith.constant 0 : i32
    return %c0_i32, %c0_i32_0 : i32, i32
  }
  func.func @transform_5(%arg0: i32) -> (i32, i32) {
    %c0_i32 = arith.constant 0 : i32
    %c0_i32_0 = arith.constant 0 : i32
    return %arg0, %c0_i32 : i32, i32
  }
}

</mosaic_0001>

<llo_original>
// kernel: tpu_custom_call.1
$region0: #{tpu_custom_call.1}
  #allocation0 [shape = 'u32[]', space=smem, size = 0x4, offset = 0x4, fixed_abs, tag = 'smem constant byte address 0x4 - core index']
  #allocation1 [shape = 'u32[72,128]{1,0:T(1,128)}', space=vmem, size = 0x9000, scoped, tag = 'internal scratch']
  %s0 = inlined_call_operand.vmem [shape: s32[8,1], index: 0, kind: input, shape index: {}]
  %s1 = inlined_call_operand.vmem [shape: s32[8,1], index: 1, kind: input, shape index: {}]
  %s2 = inlined_call_operand.vmem [shape: s32[8,1], index: 2, kind: input, shape index: {}]
  %s3 = inlined_call_operand.vmem [shape: s32[8,1], index: 3, kind: input, shape index: {}]
  %s4 = inlined_call_operand.hbm [shape: f32[256,128], index: 4, kind: input, shape index: {}]
  %s5 = inlined_call_operand.hbm [shape: f32[8,128], index: 5, kind: output, shape index: {}]
  %s6 = sld [smem:[#allocation0]]
  $region34: #{tpu_custom_call.1} parent=0
    _
  %s8 = ssub.s32 1, %s6
  %s9 = scalar_select 0, %s8, %s6
  $region1: #{tpu_custom_call.1} parent=0
    #allocation2 [shape = 'u8[131072]{0}', space=vmem, size = 0x20000, scoped, tag = 'input window, operand 4, single buffered']
    #allocation3 [shape = 's32[1]{0}', space=sflag, size = 0x4, scoped, tag = 'scoped memory for tpu_custom_call.1']
    #allocation4 [shape = 's32[1]{0}', space=sflag, size = 0x4, scoped, tag = 'scoped memory for tpu_custom_call.1']
    #allocation5 [shape = 'u8[4096]{0}', space=vmem, size = 0x1000, scoped, tag = 'output window, operand 0, single buffered']
    %10 = vsyncpa [#allocation3], 0
    %11 = vsyncpa [#allocation4], 0
    // Predicated region
    $region2: #{tpu_custom_call.1} parent=1 // pred_check
      _
    $region3: #{tpu_custom_call.1} parent=1 // pred_check_branch
      %13 = sbr.rel (0) target = $region5
    $region4: #{tpu_custom_call.1} parent=1 // pred_region
      _
    $region5: #{tpu_custom_call.1} parent=1 // pred_fallthru
      _
    // Predicated region
    $region6: #{tpu_custom_call.1} parent=1 // pred_check
      _
    $region7: #{tpu_custom_call.1} parent=1 // pred_check_branch
      %15 = sbr.rel (0) target = $region9
    $region8: #{tpu_custom_call.1} parent=1 // pred_region
      _
    $region9: #{tpu_custom_call.1} parent=1 // pred_fallthru
      _
    // Predicated region
    $region10: #{tpu_custom_call.1} parent=1 // pred_check
      _
    $region11: #{tpu_custom_call.1} parent=1 // pred_check_branch
      %17 = sbr.rel (0) target = $region13
    $region12: #{tpu_custom_call.1} parent=1 // pred_region
      _
    $region13: #{tpu_custom_call.1} parent=1 // pred_fallthru
      _
    // Predicated region
    $region14: #{tpu_custom_call.1} parent=1 // pred_check
      _
    $region15: #{tpu_custom_call.1} parent=1 // pred_check_branch
      %19 = sbr.rel (0) target = $region17
    $region16: #{tpu_custom_call.1} parent=1 // pred_region
      _
    $region17: #{tpu_custom_call.1} parent=1 // pred_fallthru
      _
    // Predicated region
    $region18: #{tpu_custom_call.1} parent=1 // pred_check
      _
    $region19: #{tpu_custom_call.1} parent=1 // pred_check_branch
      %21 = sbr.rel (0) target = $region21
    $region20: #{tpu_custom_call.1} parent=1 // pred_region
      %23 = vsyncadd [#allocation3], 0
      %s24 = sshll.u32 %s4, 4
      %s25 = int_to_ptr.hbm [resolvable:$true] %s24
      %s26 = sshll.u32 [#allocation2], 4
      %s27 = int_to_ptr.vmem [resolvable:$true] %s26
      %32 = dma.hbm_to_vmem [thread:$0]  %s25, 4096, %s27, [#allocation3], 128, 128, 8
    $region21: #{tpu_custom_call.1} parent=1 // pred_fallthru
      _
    // Predicated region
    $region22: #{tpu_custom_call.1} parent=1 // pred_check
      _
    $region23: #{tpu_custom_call.1} parent=1 // pred_check_branch
      %34 = sbr.rel (0) target = $region25
    $region24: #{tpu_custom_call.1} parent=1 // pred_region
      %36 = dma.done [#allocation3], 4096
    $region25: #{tpu_custom_call.1} parent=1 // pred_fallthru
      _
    %v37 = vlaneseq
    %v38 = vand.u32 %v37, 127
    %v39 = vadd.s32 %v38, 128
    %v40 = vld [vmem:[%s0] sm:$0xff]
    %41 = vset.pattern.permute.xlu0 0
    %42 = vperm.xlu0 %41, %v40
    %v43 = vpop.permute.xlu0 %42
    %vm44 = vcmp.eq.s32.totalorder %v43, %v38
    %vm45 = vcmp.eq.s32.totalorder %v43, %v39
    %v46 = vld [vmem:[%s1] sm:$0xff]
    %v47 = vadd.s32 %v46, 2
    %48 = vset.pattern.permute.xlu0 0
    %49 = vperm.xlu0 %48, %v47
    %v50 = vpop.permute.xlu0 %49
    %vm51 = vcmp.eq.s32.totalorder %v50, %v38
    %vm52 = vcmp.eq.s32.totalorder %v50, %v39
    %vm53 = vmor %vm44, %vm51
    %vm54 = vmor %vm45, %vm52
    %v55 = vld [vmem:[%s2] sm:$0xff]
    %v56 = vadd.s32 %v55, 9
    %57 = vset.pattern.permute.xlu0 0
    %58 = vperm.xlu0 %57, %v56
    %v59 = vpop.permute.xlu0 %58
    %vm60 = vcmp.eq.s32.totalorder %v59, %v38
    %vm61 = vcmp.eq.s32.totalorder %v59, %v39
    %vm62 = vmor %vm53, %vm60
    %vm63 = vmor %vm54, %vm61
    %v64 = vld [vmem:[%s3] sm:$0xff]
    %v65 = vadd.s32 %v64, 30
    %66 = vset.pattern.permute.xlu0 0
    %67 = vperm.xlu0 %66, %v65
    %v68 = vpop.permute.xlu0 %67
    %vm69 = vcmp.eq.s32.totalorder %v68, %v38
    %vm70 = vcmp.eq.s32.totalorder %v68, %v39
    %vm71 = vmor %vm62, %vm69
    %vm72 = vmor %vm63, %vm70
    %v73 = vsel %vm71, 1, 0
    %v74 = vsel %vm72, 1, 0
    %v75 = vcvt.s32.f32 %v73
    %v76 = vcvt.s32.f32 %v74
    %v77 = vld [vmem:[#allocation2] sm:$0xff]
    %v78 = vld [vmem:[#allocation2 + $0x8] sm:$0xff]
    %v79 = vld [vmem:[#allocation2 + $0x10] sm:$0xff]
    %v80 = vld [vmem:[#allocation2 + $0x18] sm:$0xff]
    %v81 = vld [vmem:[#allocation2 + $0x20] sm:$0xff]
    %v82 = vld [vmem:[#allocation2 + $0x28] sm:$0xff]
    %v83 = vld [vmem:[#allocation2 + $0x30] sm:$0xff]
    %v84 = vld [vmem:[#allocation2 + $0x38] sm:$0xff]
    %v85 = vld [vmem:[#allocation2 + $0x40] sm:$0xff]
    %v86 = vld [vmem:[#allocation2 + $0x48] sm:$0xff]
    %v87 = vld [vmem:[#allocation2 + $0x50] sm:$0xff]
    %v88 = vld [vmem:[#allocation2 + $0x58] sm:$0xff]
    %v89 = vld [vmem:[#allocation2 + $0x60] sm:$0xff]
    %v90 = vld [vmem:[#allocation2 + $0x68] sm:$0xff]
    %v91 = vld [vmem:[#allocation2 + $0x70] sm:$0xff]
    %v92 = vld [vmem:[#allocation2 + $0x78] sm:$0xff]
    %v93 = vld [vmem:[#allocation2 + $0x80] sm:$0xff]
    %v94 = vld [vmem:[#allocation2 + $0x88] sm:$0xff]
    %v95 = vld [vmem:[#allocation2 + $0x90] sm:$0xff]
    %v96 = vld [vmem:[#allocation2 + $0x98] sm:$0xff]
    %v97 = vld [vmem:[#allocation2 + $0xa0] sm:$0xff]
    %v98 = vld [vmem:[#allocation2 + $0xa8] sm:$0xff]
    %v99 = vld [vmem:[#allocation2 + $0xb0] sm:$0xff]
    %v100 = vld [vmem:[#allocation2 + $0xb8] sm:$0xff]
    %v101 = vld [vmem:[#allocation2 + $0xc0] sm:$0xff]
    %v102 = vld [vmem:[#allocation2 + $0xc8] sm:$0xff]
    %v103 = vld [vmem:[#allocation2 + $0xd0] sm:$0xff]
    %v104 = vld [vmem:[#allocation2 + $0xd8] sm:$0xff]
    %v105 = vld [vmem:[#allocation2 + $0xe0] sm:$0xff]
    %v106 = vld [vmem:[#allocation2 + $0xe8] sm:$0xff]
    %v107 = vld [vmem:[#allocation2 + $0xf0] sm:$0xff]
    %v108 = vld [vmem:[#allocation2 + $0xf8] sm:$0xff]
    %v109 = vand.u32 %v92, 4294901760
    %110 = vmatpush.msra.mxu0 %v109
    %v111 = vand.u32 %v91, 4294901760
    %112 = vmatpush.msra.mxu0 %v111
    %v113 = vand.u32 %v90, 4294901760
    %114 = vmatpush.msra.mxu0 %v113
    %v115 = vand.u32 %v89, 4294901760
    %116 = vmatpush.msra.mxu0 %v115
    %v117 = vand.u32 %v88, 4294901760
    %118 = vmatpush.msra.mxu0 %v117
    %v119 = vand.u32 %v87, 4294901760
    %120 = vmatpush.msra.mxu0 %v119
    %v121 = vand.u32 %v86, 4294901760
    %122 = vmatpush.msra.mxu0 %v121
    %v123 = vand.u32 %v85, 4294901760
    %124 = vmatpush.msra.mxu0 %v123
    %v125 = vand.u32 %v84, 4294901760
    %126 = vmatpush.msra.mxu0 %v125
    %v127 = vand.u32 %v83, 4294901760
    %128 = vmatpush.msra.mxu0 %v127
    %v129 = vand.u32 %v82, 4294901760
    %130 = vmatpush.msra.mxu0 %v129
    %v131 = vand.u32 %v81, 4294901760
    %132 = vmatpush.msra.mxu0 %v131
    %v133 = vand.u32 %v80, 4294901760
    %134 = vmatpush.msra.mxu0 %v133
    %v135 = vand.u32 %v79, 4294901760
    %136 = vmatpush.msra.mxu0 %v135
    %v137 = vand.u32 %v78, 4294901760
    %138 = vmatpush.msra.mxu0 %v137
    %v139 = vand.u32 %v77, 4294901760
    %140 = vmatpush.msra.mxu0 %v139
    %v141 = vand.u32 %v75, 4294901760
    %v142 = vsub.f32 %v75, %v141
    %v143 = vand.u32 %v142, 4294901760
    %v144 = vsub.f32 %v142, %v143
    %v145 = vand.u32 %v144, 4294901760
    %146 = vmatmul.f32.gmra.mxu0 %v145
    %v147 = vpop.f32.mrf.mxu0
    %v148 = vadd.f32 0.0, %v147
    %149 = vdwg.mxu0
    %v150 = vand.u32 %v92, 4294901760
    %v151 = vsub.f32 %v92, %v150
    %v152 = vand.u32 %v151, 4294901760
    %v153 = vsub.f32 %v151, %v152
    %v154 = vand.u32 %v153, 4294901760
    %155 = vmatpush.msra.mxu0 %v154
    %v156 = vand.u32 %v91, 4294901760
    %v157 = vsub.f32 %v91, %v156
    %v158 = vand.u32 %v157, 4294901760
    %v159 = vsub.f32 %v157, %v158
    %v160 = vand.u32 %v159, 4294901760
    %161 = vmatpush.msra.mxu0 %v160
    %v162 = vand.u32 %v90, 4294901760
    %v163 = vsub.f32 %v90, %v162
    %v164 = vand.u32 %v163, 4294901760
    %v165 = vsub.f32 %v163, %v164
    %v166 = vand.u32 %v165, 4294901760
    %167 = vmatpush.msra.mxu0 %v166
    %v168 = vand.u32 %v89, 4294901760
    %v169 = vsub.f32 %v89, %v168
    %v170 = vand.u32 %v169, 4294901760
    %v171 = vsub.f32 %v169, %v170
    %v172 = vand.u32 %v171, 4294901760
    %173 = vmatpush.msra.mxu0 %v172
    %v174 = vand.u32 %v88, 4294901760
    %v175 = vsub.f32 %v88, %v174
    %v176 = vand.u32 %v175, 4294901760
    %v177 = vsub.f32 %v175, %v176
    %v178 = vand.u32 %v177, 4294901760
    %179 = vmatpush.msra.mxu0 %v178
    %v180 = vand.u32 %v87, 4294901760
    %v181 = vsub.f32 %v87, %v180
    %v182 = vand.u32 %v181, 4294901760
    %v183 = vsub.f32 %v181, %v182
    %v184 = vand.u32 %v183, 4294901760
    %185 = vmatpush.msra.mxu0 %v184
    %v186 = vand.u32 %v86, 4294901760
    %v187 = vsub.f32 %v86, %v186
    %v188 = vand.u32 %v187, 4294901760
    %v189 = vsub.f32 %v187, %v188
    %v190 = vand.u32 %v189, 4294901760
    %191 = vmatpush.msra.mxu0 %v190
    %v192 = vand.u32 %v85, 4294901760
    %v193 = vsub.f32 %v85, %v192
    %v194 = vand.u32 %v193, 4294901760
    %v195 = vsub.f32 %v193, %v194
    %v196 = vand.u32 %v195, 4294901760
    %197 = vmatpush.msra.mxu0 %v196
    %v198 = vand.u32 %v84, 4294901760
    %v199 = vsub.f32 %v84, %v198
    %v200 = vand.u32 %v199, 4294901760
    %v201 = vsub.f32 %v199, %v200
    %v202 = vand.u32 %v201, 4294901760
    %203 = vmatpush.msra.mxu0 %v202
    %v204 = vand.u32 %v83, 4294901760
    %v205 = vsub.f32 %v83, %v204
    %v206 = vand.u32 %v205, 4294901760
    %v207 = vsub.f32 %v205, %v206
    %v208 = vand.u32 %v207, 4294901760
    %209 = vmatpush.msra.mxu0 %v208
    %v210 = vand.u32 %v82, 4294901760
    %v211 = vsub.f32 %v82, %v210
    %v212 = vand.u32 %v211, 4294901760
    %v213 = vsub.f32 %v211, %v212
    %v214 = vand.u32 %v213, 4294901760
    %215 = vmatpush.msra.mxu0 %v214
    %v216 = vand.u32 %v81, 4294901760
    %v217 = vsub.f32 %v81, %v216
    %v218 = vand.u32 %v217, 4294901760
    %v219 = vsub.f32 %v217, %v218
    %v220 = vand.u32 %v219, 4294901760
    %221 = vmatpush.msra.mxu0 %v220
    %v222 = vand.u32 %v80, 4294901760
    %v223 = vsub.f32 %v80, %v222
    %v224 = vand.u32 %v223, 4294901760
    %v225 = vsub.f32 %v223, %v224
    %v226 = vand.u32 %v225, 4294901760
    %227 = vmatpush.msra.mxu0 %v226
    %v228 = vand.u32 %v79, 4294901760
    %v229 = vsub.f32 %v79, %v228
    %v230 = vand.u32 %v229, 4294901760
    %v231 = vsub.f32 %v229, %v230
    %v232 = vand.u32 %v231, 4294901760
    %233 = vmatpush.msra.mxu0 %v232
    %v234 = vand.u32 %v78, 4294901760
    %v235 = vsub.f32 %v78, %v234
    %v236 = vand.u32 %v235, 4294901760
    %v237 = vsub.f32 %v235, %v236
    %v238 = vand.u32 %v237, 4294901760
    %239 = vmatpush.msra.mxu0 %v238
    %v240 = vand.u32 %v77, 4294901760
    %v241 = vsub.f32 %v77, %v240
    %v242 = vand.u32 %v241, 4294901760
    %v243 = vsub.f32 %v241, %v242
    %v244 = vand.u32 %v243, 4294901760
    %245 = vmatpush.msra.mxu0 %v244
    %v246 = vand.u32 %v75, 4294901760
    %247 = vmatmul.f32.gmra.mxu0 %v246
    %v248 = vpop.f32.mrf.mxu0
    %v249 = vadd.f32 %v148, %v248
    %250 = vdwg.mxu0
    %v251 = vand.u32 %v92, 4294901760
    %v252 = vsub.f32 %v92, %v251
    %253 = vmatpush.msra.mxu0 %v252
    %v254 = vand.u32 %v91, 4294901760
    %v255 = vsub.f32 %v91, %v254
    %256 = vmatpush.msra.mxu0 %v255
    %v257 = vand.u32 %v90, 4294901760
    %v258 = vsub.f32 %v90, %v257
    %259 = vmatpush.msra.mxu0 %v258
    %v260 = vand.u32 %v89, 4294901760
    %v261 = vsub.f32 %v89, %v260
    %262 = vmatpush.msra.mxu0 %v261
    %v263 = vand.u32 %v88, 4294901760
    %v264 = vsub.f32 %v88, %v263
    %265 = vmatpush.msra.mxu0 %v264
    %v266 = vand.u32 %v87, 4294901760
    %v267 = vsub.f32 %v87, %v266
    %268 = vmatpush.msra.mxu0 %v267
    %v269 = vand.u32 %v86, 4294901760
    %v270 = vsub.f32 %v86, %v269
    %271 = vmatpush.msra.mxu0 %v270
    %v272 = vand.u32 %v85, 4294901760
    %v273 = vsub.f32 %v85, %v272
    %274 = vmatpush.msra.mxu0 %v273
    %v275 = vand.u32 %v84, 4294901760
    %v276 = vsub.f32 %v84, %v275
    %277 = vmatpush.msra.mxu0 %v276
    %v278 = vand.u32 %v83, 4294901760
    %v279 = vsub.f32 %v83, %v278
    %280 = vmatpush.msra.mxu0 %v279
    %v281 = vand.u32 %v82, 4294901760
    %v282 = vsub.f32 %v82, %v281
    %283 = vmatpush.msra.mxu0 %v282
    %v284 = vand.u32 %v81, 4294901760
    %v285 = vsub.f32 %v81, %v284
    %286 = vmatpush.msra.mxu0 %v285
    %v287 = vand.u32 %v80, 4294901760
    %v288 = vsub.f32 %v80, %v287
    %289 = vmatpush.msra.mxu0 %v288
    %v290 = vand.u32 %v79, 4294901760
    %v291 = vsub.f32 %v79, %v290
    %292 = vmatpush.msra.mxu0 %v291
    %v293 = vand.u32 %v78, 4294901760
    %v294 = vsub.f32 %v78, %v293
    %295 = vmatpush.msra.mxu0 %v294
    %v296 = vand.u32 %v77, 4294901760
    %v297 = vsub.f32 %v77, %v296
    %298 = vmatpush.msra.mxu0 %v297
    %v299 = vand.u32 %v75, 4294901760
    %v300 = vsub.f32 %v75, %v299
    %301 = vmatmul.f32.gmra.mxu0 %v300
    %v302 = vpop.f32.mrf.mxu0
    %v303 = vadd.f32 %v249, %v302
    %304 = vdwg.mxu0
    %v305 = vand.u32 %v92, 4294901760
    %306 = vmatpush.msra.mxu0 %v305
    %v307 = vand.u32 %v91, 4294901760
    %308 = vmatpush.msra.mxu0 %v307
    %v309 = vand.u32 %v90, 4294901760
    %310 = vmatpush.msra.mxu0 %v309
    %v311 = vand.u32 %v89, 4294901760
    %312 = vmatpush.msra.mxu0 %v311
    %v313 = vand.u32 %v88, 4294901760
    %314 = vmatpush.msra.mxu0 %v313
    %v315 = vand.u32 %v87, 4294901760
    %316 = vmatpush.msra.mxu0 %v315
    %v317 = vand.u32 %v86, 4294901760
    %318 = vmatpush.msra.mxu0 %v317
    %v319 = vand.u32 %v85, 4294901760
    %320 = vmatpush.msra.mxu0 %v319
    %v321 = vand.u32 %v84, 4294901760
    %322 = vmatpush.msra.mxu0 %v321
    %v323 = vand.u32 %v83, 4294901760
    %324 = vmatpush.msra.mxu0 %v323
    %v325 = vand.u32 %v82, 4294901760
    %326 = vmatpush.msra.mxu0 %v325
    %v327 = vand.u32 %v81, 4294901760
    %328 = vmatpush.msra.mxu0 %v327
    %v329 = vand.u32 %v80, 4294901760
    %330 = vmatpush.msra.mxu0 %v329
    %v331 = vand.u32 %v79, 4294901760
    %332 = vmatpush.msra.mxu0 %v331
    %v333 = vand.u32 %v78, 4294901760
    %334 = vmatpush.msra.mxu0 %v333
    %v335 = vand.u32 %v77, 4294901760
    %336 = vmatpush.msra.mxu0 %v335
    %v337 = vand.u32 %v75, 4294901760
    %v338 = vsub.f32 %v75, %v337
    %v339 = vand.u32 %v338, 4294901760
    %340 = vmatmul.f32.gmra.mxu0 %v339
    %v341 = vpop.f32.mrf.mxu0
    %v342 = vadd.f32 %v303, %v341
    %343 = vdwg.mxu0
    %v344 = vand.u32 %v92, 4294901760
    %v345 = vsub.f32 %v92, %v344
    %v346 = vand.u32 %v345, 4294901760
    %347 = vmatpush.msra.mxu0 %v346
    %v348 = vand.u32 %v91, 4294901760
    %v349 = vsub.f32 %v91, %v348
    %v350 = vand.u32 %v349, 4294901760
    %351 = vmatpush.msra.mxu0 %v350
    %v352 = vand.u32 %v90, 4294901760
    %v353 = vsub.f32 %v90, %v352
    %v354 = vand.u32 %v353, 4294901760
    %355 = vmatpush.msra.mxu0 %v354
    %v356 = vand.u32 %v89, 4294901760
    %v357 = vsub.f32 %v89, %v356
    %v358 = vand.u32 %v357, 4294901760
    %359 = vmatpush.msra.mxu0 %v358
    %v360 = vand.u32 %v88, 4294901760
    %v361 = vsub.f32 %v88, %v360
    %v362 = vand.u32 %v361, 4294901760
    %363 = vmatpush.msra.mxu0 %v362
    %v364 = vand.u32 %v87, 4294901760
    %v365 = vsub.f32 %v87, %v364
    %v366 = vand.u32 %v365, 4294901760
    %367 = vmatpush.msra.mxu0 %v366
    %v368 = vand.u32 %v86, 4294901760
    %v369 = vsub.f32 %v86, %v368
    %v370 = vand.u32 %v369, 4294901760
    %371 = vmatpush.msra.mxu0 %v370
    %v372 = vand.u32 %v85, 4294901760
    %v373 = vsub.f32 %v85, %v372
    %v374 = vand.u32 %v373, 4294901760
    %375 = vmatpush.msra.mxu0 %v374
    %v376 = vand.u32 %v84, 4294901760
    %v377 = vsub.f32 %v84, %v376
    %v378 = vand.u32 %v377, 4294901760
    %379 = vmatpush.msra.mxu0 %v378
    %v380 = vand.u32 %v83, 4294901760
    %v381 = vsub.f32 %v83, %v380
    %v382 = vand.u32 %v381, 4294901760
    %383 = vmatpush.msra.mxu0 %v382
    %v384 = vand.u32 %v82, 4294901760
    %v385 = vsub.f32 %v82, %v384
    %v386 = vand.u32 %v385, 4294901760
    %387 = vmatpush.msra.mxu0 %v386
    %v388 = vand.u32 %v81, 4294901760
    %v389 = vsub.f32 %v81, %v388
    %v390 = vand.u32 %v389, 4294901760
    %391 = vmatpush.msra.mxu0 %v390
    %v392 = vand.u32 %v80, 4294901760
    %v393 = vsub.f32 %v80, %v392
    %v394 = vand.u32 %v393, 4294901760
    %395 = vmatpush.msra.mxu0 %v394
    %v396 = vand.u32 %v79, 4294901760
    %v397 = vsub.f32 %v79, %v396
    %v398 = vand.u32 %v397, 4294901760
    %399 = vmatpush.msra.mxu0 %v398
    %v400 = vand.u32 %v78, 4294901760
    %v401 = vsub.f32 %v78, %v400
    %v402 = vand.u32 %v401, 4294901760
    %403 = vmatpush.msra.mxu0 %v402
    %v404 = vand.u32 %v77, 4294901760
    %v405 = vsub.f32 %v77, %v404
    %v406 = vand.u32 %v405, 4294901760
    %407 = vmatpush.msra.mxu0 %v406
    %v408 = vand.u32 %v75, 4294901760
    %409 = vmatmul.f32.gmra.mxu0 %v408
    %v410 = vpop.f32.mrf.mxu0
    %v411 = vadd.f32 %v342, %v410
    %412 = vdwg.mxu0
    %v413 = vand.u32 %v92, 4294901760
    %414 = vmatpush.msra.mxu0 %v413
    %v415 = vand.u32 %v91, 4294901760
    %416 = vmatpush.msra.mxu0 %v415
    %v417 = vand.u32 %v90, 4294901760
    %418 = vmatpush.msra.mxu0 %v417
    %v419 = vand.u32 %v89, 4294901760
    %420 = vmatpush.msra.mxu0 %v419
    %v421 = vand.u32 %v88, 4294901760
    %422 = vmatpush.msra.mxu0 %v421
    %v423 = vand.u32 %v87, 4294901760
    %424 = vmatpush.msra.mxu0 %v423
    %v425 = vand.u32 %v86, 4294901760
    %426 = vmatpush.msra.mxu0 %v425
    %v427 = vand.u32 %v85, 4294901760
    %428 = vmatpush.msra.mxu0 %v427
    %v429 = vand.u32 %v84, 4294901760
    %430 = vmatpush.msra.mxu0 %v429
    %v431 = vand.u32 %v83, 4294901760
    %432 = vmatpush.msra.mxu0 %v431
    %v433 = vand.u32 %v82, 4294901760
    %434 = vmatpush.msra.mxu0 %v433
    %v435 = vand.u32 %v81, 4294901760
    %436 = vmatpush.msra.mxu0 %v435
    %v437 = vand.u32 %v80, 4294901760
    %438 = vmatpush.msra.mxu0 %v437
    %v439 = vand.u32 %v79, 4294901760
    %440 = vmatpush.msra.mxu0 %v439
    %v441 = vand.u32 %v78, 4294901760
    %442 = vmatpush.msra.mxu0 %v441
    %v443 = vand.u32 %v77, 4294901760
    %444 = vmatpush.msra.mxu0 %v443
    %v445 = vand.u32 %v75, 4294901760
    %446 = vmatmul.f32.gmra.mxu0 %v445
    %v447 = vpop.f32.mrf.mxu0
    %v448 = vadd.f32 %v411, %v447
    %449 = vdwg.mxu0
    %v450 = vand.u32 %v108, 4294901760
    %451 = vmatpush.msra.mxu0 %v450
    %v452 = vand.u32 %v107, 4294901760
    %453 = vmatpush.msra.mxu0 %v452
    %v454 = vand.u32 %v106, 4294901760
    %455 = vmatpush.msra.mxu0 %v454
    %v456 = vand.u32 %v105, 4294901760
    %457 = vmatpush.msra.mxu0 %v456
    %v458 = vand.u32 %v104, 4294901760
    %459 = vmatpush.msra.mxu0 %v458
    %v460 = vand.u32 %v103, 4294901760
    %461 = vmatpush.msra.mxu0 %v460
    %v462 = vand.u32 %v102, 4294901760
    %463 = vmatpush.msra.mxu0 %v462
    %v464 = vand.u32 %v101, 4294901760
    %465 = vmatpush.msra.mxu0 %v464
    %v466 = vand.u32 %v100, 4294901760
    %467 = vmatpush.msra.mxu0 %v466
    %v468 = vand.u32 %v99, 4294901760
    %469 = vmatpush.msra.mxu0 %v468
    %v470 = vand.u32 %v98, 4294901760
    %471 = vmatpush.msra.mxu0 %v470
    %v472 = vand.u32 %v97, 4294901760
    %473 = vmatpush.msra.mxu0 %v472
    %v474 = vand.u32 %v96, 4294901760
    %475 = vmatpush.msra.mxu0 %v474
    %v476 = vand.u32 %v95, 4294901760
    %477 = vmatpush.msra.mxu0 %v476
    %v478 = vand.u32 %v94, 4294901760
    %479 = vmatpush.msra.mxu0 %v478
    %v480 = vand.u32 %v93, 4294901760
    %481 = vmatpush.msra.mxu0 %v480
    %v482 = vand.u32 %v76, 4294901760
    %v483 = vsub.f32 %v76, %v482
    %v484 = vand.u32 %v483, 4294901760
    %v485 = vsub.f32 %v483, %v484
    %v486 = vand.u32 %v485, 4294901760
    %487 = vmatmul.f32.gmra.mxu0 %v486
    %v488 = vpop.f32.mrf.mxu0
    %v489 = vadd.f32 %v448, %v488
    %490 = vdwg.mxu0
    %v491 = vand.u32 %v108, 4294901760
    %v492 = vsub.f32 %v108, %v491
    %v493 = vand.u32 %v492, 4294901760
    %v494 = vsub.f32 %v492, %v493
    %v495 = vand.u32 %v494, 4294901760
    %496 = vmatpush.msra.mxu0 %v495
    %v497 = vand.u32 %v107, 4294901760
    %v498 = vsub.f32 %v107, %v497
    %v499 = vand.u32 %v498, 4294901760
    %v500 = vsub.f32 %v498, %v499
    %v501 = vand.u32 %v500, 4294901760
    %502 = vmatpush.msra.mxu0 %v501
    %v503 = vand.u32 %v106, 4294901760
    %v504 = vsub.f32 %v106, %v503
    %v505 = vand.u32 %v504, 4294901760
    %v506 = vsub.f32 %v504, %v505
    %v507 = vand.u32 %v506, 4294901760
    %508 = vmatpush.msra.mxu0 %v507
    %v509 = vand.u32 %v105, 4294901760
    %v510 = vsub.f32 %v105, %v509
    %v511 = vand.u32 %v510, 4294901760
    %v512 = vsub.f32 %v510, %v511
    %v513 = vand.u32 %v512, 4294901760
    %514 = vmatpush.msra.mxu0 %v513
    %v515 = vand.u32 %v104, 4294901760
    %v516 = vsub.f32 %v104, %v515
    %v517 = vand.u32 %v516, 4294901760
    %v518 = vsub.f32 %v516, %v517
    %v519 = vand.u32 %v518, 4294901760
    %520 = vmatpush.msra.mxu0 %v519
    %v521 = vand.u32 %v103, 4294901760
    %v522 = vsub.f32 %v103, %v521
    %v523 = vand.u32 %v522, 4294901760
    %v524 = vsub.f32 %v522, %v523
    %v525 = vand.u32 %v524, 4294901760
    %526 = vmatpush.msra.mxu0 %v525
    %v527 = vand.u32 %v102, 4294901760
    %v528 = vsub.f32 %v102, %v527
    %v529 = vand.u32 %v528, 4294901760
    %v530 = vsub.f32 %v528, %v529
    %v531 = vand.u32 %v530, 4294901760
    %532 = vmatpush.msra.mxu0 %v531
    %v533 = vand.u32 %v101, 4294901760
    %v534 = vsub.f32 %v101, %v533
    %v535 = vand.u32 %v534, 4294901760
    %v536 = vsub.f32 %v534, %v535
    %v537 = vand.u32 %v536, 4294901760
    %538 = vmatpush.msra.mxu0 %v537
    %v539 = vand.u32 %v100, 4294901760
    %v540 = vsub.f32 %v100, %v539
    %v541 = vand.u32 %v540, 4294901760
    %v542 = vsub.f32 %v540, %v541
    %v543 = vand.u32 %v542, 4294901760
    %544 = vmatpush.msra.mxu0 %v543
    %v545 = vand.u32 %v99, 4294901760
    %v546 = vsub.f32 %v99, %v545
    %v547 = vand.u32 %v546, 4294901760
    %v548 = vsub.f32 %v546, %v547
    %v549 = vand.u32 %v548, 4294901760
    %550 = vmatpush.msra.mxu0 %v549
    %v551 = vand.u32 %v98, 4294901760
    %v552 = vsub.f32 %v98, %v551
    %v553 = vand.u32 %v552, 4294901760
    %v554 = vsub.f32 %v552, %v553
    %v555 = vand.u32 %v554, 4294901760
    %556 = vmatpush.msra.mxu0 %v555
    %v557 = vand.u32 %v97, 4294901760
    %v558 = vsub.f32 %v97, %v557
    %v559 = vand.u32 %v558, 4294901760
    %v560 = vsub.f32 %v558, %v559
    %v561 = vand.u32 %v560, 4294901760
    %562 = vmatpush.msra.mxu0 %v561
    %v563 = vand.u32 %v96, 4294901760
    %v564 = vsub.f32 %v96, %v563
    %v565 = vand.u32 %v564, 4294901760
    %v566 = vsub.f32 %v564, %v565
    %v567 = vand.u32 %v566, 4294901760
    %568 = vmatpush.msra.mxu0 %v567
    %v569 = vand.u32 %v95, 4294901760
    %v570 = vsub.f32 %v95, %v569
    %v571 = vand.u32 %v570, 4294901760
    %v572 = vsub.f32 %v570, %v571
    %v573 = vand.u32 %v572, 4294901760
    %574 = vmatpush.msra.mxu0 %v573
    %v575 = vand.u32 %v94, 4294901760
    %v576 = vsub.f32 %v94, %v575
    %v577 = vand.u32 %v576, 4294901760
    %v578 = vsub.f32 %v576, %v577
    %v579 = vand.u32 %v578, 4294901760
    %580 = vmatpush.msra.mxu0 %v579
    %v581 = vand.u32 %v93, 4294901760
    %v582 = vsub.f32 %v93, %v581
    %v583 = vand.u32 %v582, 4294901760
    %v584 = vsub.f32 %v582, %v583
    %v585 = vand.u32 %v584, 4294901760
    %586 = vmatpush.msra.mxu0 %v585
    %v587 = vand.u32 %v76, 4294901760
    %588 = vmatmul.f32.gmra.mxu0 %v587
    %v589 = vpop.f32.mrf.mxu0
    %v590 = vadd.f32 %v489, %v589
    %591 = vdwg.mxu0
    %v592 = vand.u32 %v108, 4294901760
    %v593 = vsub.f32 %v108, %v592
    %594 = vmatpush.msra.mxu0 %v593
    %v595 = vand.u32 %v107, 4294901760
    %v596 = vsub.f32 %v107, %v595
    %597 = vmatpush.msra.mxu0 %v596
    %v598 = vand.u32 %v106, 4294901760
    %v599 = vsub.f32 %v106, %v598
    %600 = vmatpush.msra.mxu0 %v599
    %v601 = vand.u32 %v105, 4294901760
    %v602 = vsub.f32 %v105, %v601
    %603 = vmatpush.msra.mxu0 %v602
    %v604 = vand.u32 %v104, 4294901760
    %v605 = vsub.f32 %v104, %v604
    %606 = vmatpush.msra.mxu0 %v605
    %v607 = vand.u32 %v103, 4294901760
    %v608 = vsub.f32 %v103, %v607
    %609 = vmatpush.msra.mxu0 %v608
    %v610 = vand.u32 %v102, 4294901760
    %v611 = vsub.f32 %v102, %v610
    %612 = vmatpush.msra.mxu0 %v611
    %v613 = vand.u32 %v101, 4294901760
    %v614 = vsub.f32 %v101, %v613
    %615 = vmatpush.msra.mxu0 %v614
    %v616 = vand.u32 %v100, 4294901760
    %v617 = vsub.f32 %v100, %v616
    %618 = vmatpush.msra.mxu0 %v617
    %v619 = vand.u32 %v99, 4294901760
    %v620 = vsub.f32 %v99, %v619
    %621 = vmatpush.msra.mxu0 %v620
    %v622 = vand.u32 %v98, 4294901760
    %v623 = vsub.f32 %v98, %v622
    %624 = vmatpush.msra.mxu0 %v623
    %v625 = vand.u32 %v97, 4294901760
    %v626 = vsub.f32 %v97, %v625
    %627 = vmatpush.msra.mxu0 %v626
    %v628 = vand.u32 %v96, 4294901760
    %v629 = vsub.f32 %v96, %v628
    %630 = vmatpush.msra.mxu0 %v629
    %v631 = vand.u32 %v95, 4294901760
    %v632 = vsub.f32 %v95, %v631
    %633 = vmatpush.msra.mxu0 %v632
    %v634 = vand.u32 %v94, 4294901760
    %v635 = vsub.f32 %v94, %v634
    %636 = vmatpush.msra.mxu0 %v635
    %v637 = vand.u32 %v93, 4294901760
    %v638 = vsub.f32 %v93, %v637
    %639 = vmatpush.msra.mxu0 %v638
    %v640 = vand.u32 %v76, 4294901760
    %v641 = vsub.f32 %v76, %v640
    %642 = vmatmul.f32.gmra.mxu0 %v641
    %v643 = vpop.f32.mrf.mxu0
    %v644 = vadd.f32 %v590, %v643
    %645 = vdwg.mxu0
    %v646 = vand.u32 %v108, 4294901760
    %647 = vmatpush.msra.mxu0 %v646
    %v648 = vand.u32 %v107, 4294901760
    %649 = vmatpush.msra.mxu0 %v648
    %v650 = vand.u32 %v106, 4294901760
    %651 = vmatpush.msra.mxu0 %v650
    %v652 = vand.u32 %v105, 4294901760
    %653 = vmatpush.msra.mxu0 %v652
    %v654 = vand.u32 %v104, 4294901760
    %655 = vmatpush.msra.mxu0 %v654
    %v656 = vand.u32 %v103, 4294901760
    %657 = vmatpush.msra.mxu0 %v656
    %v658 = vand.u32 %v102, 4294901760
    %659 = vmatpush.msra.mxu0 %v658
    %v660 = vand.u32 %v101, 4294901760
    %661 = vmatpush.msra.mxu0 %v660
    %v662 = vand.u32 %v100, 4294901760
    %663 = vmatpush.msra.mxu0 %v662
    %v664 = vand.u32 %v99, 4294901760
    %665 = vmatpush.msra.mxu0 %v664
    %v666 = vand.u32 %v98, 4294901760
    %667 = vmatpush.msra.mxu0 %v666
    %v668 = vand.u32 %v97, 4294901760
    %669 = vmatpush.msra.mxu0 %v668
    %v670 = vand.u32 %v96, 4294901760
    %671 = vmatpush.msra.mxu0 %v670
    %v672 = vand.u32 %v95, 4294901760
    %673 = vmatpush.msra.mxu0 %v672
    %v674 = vand.u32 %v94, 4294901760
    %675 = vmatpush.msra.mxu0 %v674
    %v676 = vand.u32 %v93, 4294901760
    %677 = vmatpush.msra.mxu0 %v676
    %v678 = vand.u32 %v76, 4294901760
    %v679 = vsub.f32 %v76, %v678
    %v680 = vand.u32 %v679, 4294901760
    %681 = vmatmul.f32.gmra.mxu0 %v680
    %v682 = vpop.f32.mrf.mxu0
    %v683 = vadd.f32 %v644, %v682
    %684 = vdwg.mxu0
    %v685 = vand.u32 %v108, 4294901760
    %v686 = vsub.f32 %v108, %v685
    %v687 = vand.u32 %v686, 4294901760
    %688 = vmatpush.msra.mxu0 %v687
    %v689 = vand.u32 %v107, 4294901760
    %v690 = vsub.f32 %v107, %v689
    %v691 = vand.u32 %v690, 4294901760
    %692 = vmatpush.msra.mxu0 %v691
    %v693 = vand.u32 %v106, 4294901760
    %v694 = vsub.f32 %v106, %v693
    %v695 = vand.u32 %v694, 4294901760
    %696 = vmatpush.msra.mxu0 %v695
    %v697 = vand.u32 %v105, 4294901760
    %v698 = vsub.f32 %v105, %v697
    %v699 = vand.u32 %v698, 4294901760
    %700 = vmatpush.msra.mxu0 %v699
    %v701 = vand.u32 %v104, 4294901760
    %v702 = vsub.f32 %v104, %v701
    %v703 = vand.u32 %v702, 4294901760
    %704 = vmatpush.msra.mxu0 %v703
    %v705 = vand.u32 %v103, 4294901760
    %v706 = vsub.f32 %v103, %v705
    %v707 = vand.u32 %v706, 4294901760
    %708 = vmatpush.msra.mxu0 %v707
    %v709 = vand.u32 %v102, 4294901760
    %v710 = vsub.f32 %v102, %v709
    %v711 = vand.u32 %v710, 4294901760
    %712 = vmatpush.msra.mxu0 %v711
    %v713 = vand.u32 %v101, 4294901760
    %v714 = vsub.f32 %v101, %v713
    %v715 = vand.u32 %v714, 4294901760
    %716 = vmatpush.msra.mxu0 %v715
    %v717 = vand.u32 %v100, 4294901760
    %v718 = vsub.f32 %v100, %v717
    %v719 = vand.u32 %v718, 4294901760
    %720 = vmatpush.msra.mxu0 %v719
    %v721 = vand.u32 %v99, 4294901760
    %v722 = vsub.f32 %v99, %v721
    %v723 = vand.u32 %v722, 4294901760
    %724 = vmatpush.msra.mxu0 %v723
    %v725 = vand.u32 %v98, 4294901760
    %v726 = vsub.f32 %v98, %v725
    %v727 = vand.u32 %v726, 4294901760
    %728 = vmatpush.msra.mxu0 %v727
    %v729 = vand.u32 %v97, 4294901760
    %v730 = vsub.f32 %v97, %v729
    %v731 = vand.u32 %v730, 4294901760
    %732 = vmatpush.msra.mxu0 %v731
    %v733 = vand.u32 %v96, 4294901760
    %v734 = vsub.f32 %v96, %v733
    %v735 = vand.u32 %v734, 4294901760
    %736 = vmatpush.msra.mxu0 %v735
    %v737 = vand.u32 %v95, 4294901760
    %v738 = vsub.f32 %v95, %v737
    %v739 = vand.u32 %v738, 4294901760
    %740 = vmatpush.msra.mxu0 %v739
    %v741 = vand.u32 %v94, 4294901760
    %v742 = vsub.f32 %v94, %v741
    %v743 = vand.u32 %v742, 4294901760
    %744 = vmatpush.msra.mxu0 %v743
    %v745 = vand.u32 %v93, 4294901760
    %v746 = vsub.f32 %v93, %v745
    %v747 = vand.u32 %v746, 4294901760
    %748 = vmatpush.msra.mxu0 %v747
    %v749 = vand.u32 %v76, 4294901760
    %750 = vmatmul.f32.gmra.mxu0 %v749
    %v751 = vpop.f32.mrf.mxu0
    %v752 = vadd.f32 %v683, %v751
    %753 = vdwg.mxu0
    %v754 = vand.u32 %v108, 4294901760
    %755 = vmatpush.msra.mxu0 %v754
    %v756 = vand.u32 %v107, 4294901760
    %757 = vmatpush.msra.mxu0 %v756
    %v758 = vand.u32 %v106, 4294901760
    %759 = vmatpush.msra.mxu0 %v758
    %v760 = vand.u32 %v105, 4294901760
    %761 = vmatpush.msra.mxu0 %v760
    %v762 = vand.u32 %v104, 4294901760
    %763 = vmatpush.msra.mxu0 %v762
    %v764 = vand.u32 %v103, 4294901760
    %765 = vmatpush.msra.mxu0 %v764
    %v766 = vand.u32 %v102, 4294901760
    %767 = vmatpush.msra.mxu0 %v766
    %v768 = vand.u32 %v101, 4294901760
    %769 = vmatpush.msra.mxu0 %v768
    %v770 = vand.u32 %v100, 4294901760
    %771 = vmatpush.msra.mxu0 %v770
    %v772 = vand.u32 %v99, 4294901760
    %773 = vmatpush.msra.mxu0 %v772
    %v774 = vand.u32 %v98, 4294901760
    %775 = vmatpush.msra.mxu0 %v774
    %v776 = vand.u32 %v97, 4294901760
    %777 = vmatpush.msra.mxu0 %v776
    %v778 = vand.u32 %v96, 4294901760
    %779 = vmatpush.msra.mxu0 %v778
    %v780 = vand.u32 %v95, 4294901760
    %781 = vmatpush.msra.mxu0 %v780
    %v782 = vand.u32 %v94, 4294901760
    %783 = vmatpush.msra.mxu0 %v782
    %v784 = vand.u32 %v93, 4294901760
    %785 = vmatpush.msra.mxu0 %v784
    %v786 = vand.u32 %v76, 4294901760
    %787 = vmatmul.f32.gmra.mxu0 %v786
    %v788 = vpop.f32.mrf.mxu0
    %v789 = vadd.f32 %v752, %v788
    %790 = vdwg.mxu0
    %791 = vst [vmem:[#allocation5] sm:$0xff] %v789
    // Predicated region
    $region26: #{tpu_custom_call.1} parent=1 // pred_check
      _
    $region27: #{tpu_custom_call.1} parent=1 // pred_check_branch
      %793 = sbr.rel (0) target = $region29
    $region28: #{tpu_custom_call.1} parent=1 // pred_region
      %795 = vsyncadd [#allocation4], 0
      %s797 = sshll.u32 [#allocation5], 4
      %s798 = int_to_ptr.vmem [resolvable:$true] %s797
      %s799 = sshll.u32 %s5, 4
      %s800 = int_to_ptr.hbm [resolvable:$true] %s799
      %802 = dma.vmem_to_hbm [thread:$0]  %s798, 128, %s800, [#allocation4]
    $region29: #{tpu_custom_call.1} parent=1 // pred_fallthru
      _
    // Predicated region
    $region30: #{tpu_custom_call.1} parent=1 // pred_check
      _
    $region31: #{tpu_custom_call.1} parent=1 // pred_check_branch
      %804 = sbr.rel (0) target = $region33
    $region32: #{tpu_custom_call.1} parent=1 // pred_region
      %806 = dma.done [#allocation4], 128
    $region33: #{tpu_custom_call.1} parent=1 // pred_fallthru
      _
    %807 = vsyncpa [#allocation3], 1
    %808 = vsyncpa [#allocation4], 1

</llo_original>
